<compile_context>
chip_gen: v7x
topology: tpu7x:2x2x1
jax: 0.10.0
libtpu: 0.0.40
codegen_flags: <defaults>
</compile_context>

<pallas_src>
import functools

import jax
import jax.numpy as jnp
from jax.experimental import pallas as pl
from jax.experimental.pallas import tpu as pltpu

BN_EPS = 1e-5
_VMEM_LIMIT = 48 * 1024 * 1024    # safe on v5e/v6e (128 MiB) and v7x (64 MiB phys)
_VMEM_BUDGET = 20 * 1024 * 1024   # target double-buffered working set per stage


def _round_up(n, m):
    return (n + m - 1) // m * m


# ---------------------------------------------------------------------------
# Kernel A: conv1 (1x1, no bias) + per-block partial BN statistics.
# ---------------------------------------------------------------------------
def conv1_stats_kernel(x_ref, w1t_ref, h_ref, stats_ref):
    # 1x1 conv == per-token matmul, f32 accumulation on the MXU.
    hf = jnp.dot(x_ref[...], w1t_ref[...], preferred_element_type=jnp.float32)
    h_ref[...] = hf.astype(h_ref.dtype)

    # Partial BatchNorm statistics for this block (row 0: sum, row 1: sum of
    # squares, padded to a full 8-sublane tile).  Each grid step writes its
    # own block, so the grid axis stays "parallel".
    s = jnp.sum(hf, axis=0, keepdims=True)
    ss = jnp.sum(hf * hf, axis=0, keepdims=True)
    pad = jnp.zeros((6, hf.shape[1]), jnp.float32)
    stats_ref[...] = jnp.concatenate([s, ss, pad], axis=0)


# ---------------------------------------------------------------------------
# Kernel B: fused BatchNorm (precomputed scale/shift) + ReLU + conv2 (1x1).
# ---------------------------------------------------------------------------
def bn_relu_conv2_kernel(h_ref, scale_ref, shift_ref, w2t_ref, b2_ref, y_ref):
    h = h_ref[...].astype(jnp.float32) * scale_ref[...] + shift_ref[...]
    h = jnp.maximum(h, 0.0)
    y = jnp.dot(h.astype(w2t_ref.dtype), w2t_ref[...],
                preferred_element_type=jnp.float32) + b2_ref[...]
    y_ref[...] = y.astype(y_ref.dtype)


def _conv1_and_stats(x2d, w1t, *, tm, h_dtype):
    M, c_in_p = x2d.shape
    inner_p = w1t.shape[1]
    nblk = M // tm
    return pl.pallas_call(
        conv1_stats_kernel,
        out_shape=(
            jax.ShapeDtypeStruct((M, inner_p), h_dtype),
            jax.ShapeDtypeStruct((nblk, 8, inner_p), jnp.float32),
        ),
        grid_spec=pltpu.PrefetchScalarGridSpec(
            num_scalar_prefetch=0,
            grid=(nblk,),
            in_specs=[
                pl.BlockSpec((tm, c_in_p), lambda i: (i, 0)),
                pl.BlockSpec((c_in_p, inner_p), lambda i: (0, 0)),
            ],
            out_specs=[
                pl.BlockSpec((tm, inner_p), lambda i: (i, 0)),
                pl.BlockSpec((None, 8, inner_p), lambda i: (i, 0, 0)),
            ],
        ),
        compiler_params=pltpu.CompilerParams(
            dimension_semantics=("parallel",),
            vmem_limit_bytes=_VMEM_LIMIT),
    )(x2d, w1t)


def _bn_relu_conv2(h, scale, shift, w2t, b2, *, tm):
    M, inner_p = h.shape
    out_p = w2t.shape[1]
    nblk = M // tm
    return pl.pallas_call(
        bn_relu_conv2_kernel,
        out_shape=jax.ShapeDtypeStruct((M, out_p), jnp.float32),
        grid_spec=pltpu.PrefetchScalarGridSpec(
            num_scalar_prefetch=0,
            grid=(nblk,),
            in_specs=[
                pl.BlockSpec((tm, inner_p), lambda i: (i, 0)),
                pl.BlockSpec((1, inner_p), lambda i: (0, 0)),
                pl.BlockSpec((1, inner_p), lambda i: (0, 0)),
                pl.BlockSpec((inner_p, out_p), lambda i: (0, 0)),
                pl.BlockSpec((1, out_p), lambda i: (0, 0)),
            ],
            out_specs=pl.BlockSpec((tm, out_p), lambda i: (i, 0)),
        ),
        compiler_params=pltpu.CompilerParams(
            dimension_semantics=("parallel",),
            vmem_limit_bytes=_VMEM_LIMIT),
    )(h, scale, shift, w2t, b2)


def _pick_tm(tm_req, M, c_in_p, inner_p, out_p, itemsize):
    """Largest row tile (multiple of 16) that keeps the double-buffered
    working set of either stage under a conservative, chip-agnostic budget."""
    tm = max(16, min(_round_up(tm_req, 16), _round_up(M, 16)))

    def est(t):
        s1 = (2 * t * (c_in_p + inner_p) * itemsize      # x + h blocks
              + 2 * c_in_p * inner_p * itemsize           # resident w1t
              + 2 * 8 * inner_p * 4)                      # stats block
        s2 = (2 * t * inner_p * itemsize                  # h block
              + 2 * t * out_p * 4                         # y block (f32)
              + 2 * inner_p * out_p * itemsize            # resident w2t
              + 4 * inner_p * 4 + 2 * out_p * 4)          # scale/shift/b2
        return max(s1, s2)

    while tm > 16 and est(tm) > _VMEM_BUDGET:
        tm = max(16, _round_up(tm // 2, 16))
    return tm


@functools.partial(jax.jit, static_argnames=("tm", "compute_dtype"))
def project_mlp_forward(x, params, *, tm=512, compute_dtype=jnp.bfloat16):
    """x: [B, L, C_in] or [L, C_in]  ->  [B, L, out_dim] (or [L, out_dim])."""
    add_dim = x.ndim == 2
    if add_dim:
        x = x[:, None, :]          # matches torch unsqueeze(1): [B, 1, C]
    B, L, c_in = x.shape
    w1, gamma, beta, w2, b2 = (params[k] for k in
                               ("w1", "gamma", "beta", "w2", "b2"))
    # params["b1"] is intentionally unused: a conv bias immediately followed
    # by training-mode BatchNorm is a mathematical no-op (mean absorbs it).
    inner = w1.shape[0]
    out_dim = w2.shape[0]
    cdt = jnp.dtype(compute_dtype)

    # Lane-pad the channel axes to multiples of 128 (padded channels are all
    # zero: gamma/beta 0 there, so BN/ReLU/conv2 keep them exactly zero).
    c_in_p = _round_up(c_in, 128)
    inner_p = _round_up(inner, 128)
    out_p = _round_up(out_dim, 128)

    M = B * L
    tm_eff = _pick_tm(tm, M, c_in_p, inner_p, out_p, cdt.itemsize)
    M_pad = _round_up(M, tm_eff)

    # Zero-pad tokens.  With no conv1 bias the padded rows contribute exactly
    # 0 to sum / sum-of-squares, and we divide by the true M below.
    x2d = jnp.zeros((M_pad, c_in_p), cdt)
    x2d = x2d.at[:M, :c_in].set(x.reshape(M, c_in).astype(cdt))

    # Pre-transposed, lane-padded weights (transpose once in the wrapper so
    # the kernels feed the MXU the canonical [M,K]x[K,N] layout).
    w1t = jnp.zeros((c_in_p, inner_p), cdt).at[:c_in, :inner].set(w1.T.astype(cdt))
    w2t = jnp.zeros((inner_p, out_p), cdt).at[:inner, :out_dim].set(w2.T.astype(cdt))
    b2p = jnp.zeros((1, out_p), jnp.float32).at[0, :out_dim].set(
        b2.astype(jnp.float32))
    gamma_p = jnp.zeros((inner_p,), jnp.float32).at[:inner].set(
        gamma.astype(jnp.float32))
    beta_p = jnp.zeros((inner_p,), jnp.float32).at[:inner].set(
        beta.astype(jnp.float32))

    # Stage 1: 1x1 conv + per-block partial BN statistics (Pallas).
    h, stats = _conv1_and_stats(x2d, w1t, tm=tm_eff, h_dtype=cdt)

    # Tiny [inner]-sized glue: training-mode BN stats (biased variance).
    total = jnp.sum(stats, axis=0)                 # [8, inner_p]
    mean = total[0] / M
    var = jnp.maximum(total[1] / M - mean * mean, 0.0)
    invstd = jax.lax.rsqrt(var + BN_EPS)
    scale = (gamma_p * invstd).reshape(1, inner_p)
    shift = (beta_p - mean * gamma_p * invstd).reshape(1, inner_p)

    # Stage 2: fused BN normalize + ReLU + 1x1 conv (Pallas).
    y = _bn_relu_conv2(h, scale, shift, w2t, b2p, tm=tm_eff)

    y = y[:M, :out_dim].reshape(B, L, out_dim)
    if add_dim:
        y = y[:, 0, :]
    return y


def make_params(key, in_dim, inner_dim, out_dim):
    k1, k2, k3, k4 = jax.random.split(key, 4)
    # Conv1d weights have PyTorch shape (out_ch, in_ch, 1); we drop the k=1 dim.
    w1 = jax.random.normal(k1, (inner_dim, in_dim), jnp.float32) * 0.05
    b1 = jax.random.normal(k2, (inner_dim,), jnp.float32) * 0.05
    w2 = jax.random.normal(k3, (out_dim, inner_dim), jnp.float32) * 0.05
    b2 = jax.random.normal(k4, (out_dim,), jnp.float32) * 0.05
    # BatchNorm1d init: weight=1, bias=0 (as in PyTorch).
    gamma = jnp.ones((inner_dim,), jnp.float32)
    beta = jnp.zeros((inner_dim,), jnp.float32)
    return dict(w1=w1, b1=b1, gamma=gamma, beta=beta, w2=w2, b2=b2)


def reference_forward(x, params):
    """Pure-JAX reference mirroring the PyTorch module in training mode."""
    h = jnp.einsum("blc,dc->bld", x, params["w1"]) + params["b1"]
    mean = h.mean(axis=(0, 1))
    var = h.var(axis=(0, 1))                       # biased
    h = (h - mean) * jax.lax.rsqrt(var + BN_EPS) * params["gamma"] + params["beta"]
    h = jnp.maximum(h, 0.0)
    return jnp.einsum("bld,od->blo", h, params["w2"]) + params["b2"]


if __name__ == "__main__":
    key = jax.random.PRNGKey(0)
    kx, kp = jax.random.split(key)

    B, L, in_dim, inner_dim, out_dim = 2, 8, 32, 64, 32
    x = jax.random.normal(kx, (B, L, in_dim), jnp.float32)
    params = make_params(kp, in_dim, inner_dim, out_dim)
    y_ref = reference_forward(x, params)

    # f32 compute path: tight correctness check.
    y32 = project_mlp_forward(x, params, compute_dtype=jnp.float32)
    y32 = jax.block_until_ready(y32)
    assert y32.shape == (B, L, out_dim), y32.shape
    assert jnp.allclose(y32, y_ref, atol=1e-3, rtol=1e-3), "f32 mismatch vs reference"

    # bf16 compute path (default, perf-optimized): looser tolerance.
    ybf = project_mlp_forward(x, params)           # compute_dtype=bf16, tm=512
    ybf = jax.block_until_ready(ybf)
    assert ybf.shape == (B, L, out_dim), ybf.shape
    assert jnp.allclose(ybf, y_ref, atol=5e-2, rtol=5e-2), "bf16 mismatch vs reference"

    print("KERNEL_OK")
</pallas_src>

<mosaic_0001>
module attributes {stable_mosaic.version = 11 : i64} {
  func.func @conv1_stats_kernel(%arg0: i32, %arg1: memref<16x128xf32, #tpu.memory_space<vmem>>, %arg2: memref<128x128xf32, #tpu.memory_space<vmem>>, %arg3: memref<16x128xf32, #tpu.memory_space<vmem>>, %arg4: memref<1x8x128xf32, #tpu.memory_space<vmem>>) attributes {dimension_semantics = [#tpu.dimension_semantics<parallel>], iteration_bounds = array<i64: 1>, scalar_prefetch = 0 : i64, scratch_operands = 0 : i64, tpu.core_type = #tpu.core_type<tc>, window_params = [{transform_indices = @transform_0, window_bounds = array<i64: 16, 128>}, {pipeline_mode = #tpu.pipeline_mode<synchronous>, transform_indices = @transform_1, window_bounds = array<i64: 128, 128>}, {transform_indices = @transform_2, window_bounds = array<i64: 16, 128>}, {transform_indices = @transform_3, window_bounds = array<i64: 1, 8, 128>}]} {
    %c0 = arith.constant 0 : index
    %c0_0 = arith.constant 0 : index
    %0 = vector.load %arg1[%c0, %c0_0] : memref<16x128xf32, #tpu.memory_space<vmem>>, vector<16x128xf32>
    %c0_1 = arith.constant 0 : index
    %c0_2 = arith.constant 0 : index
    %1 = vector.load %arg2[%c0_1, %c0_2] : memref<128x128xf32, #tpu.memory_space<vmem>>, vector<128x128xf32>
    %cst = arith.constant dense<0.000000e+00> : vector<16x128xf32>
    %2 = tpu.matmul %0, %1, %cst {dimension_numbers = #tpu.dot_dimension_numbers<[1], [0], [0], [1], [0, 0, 1, 1], [], []>} : vector<16x128xf32>, vector<128x128xf32>, vector<16x128xf32> -> vector<16x128xf32>
    %c0_3 = arith.constant 0 : index
    %c0_4 = arith.constant 0 : index
    %3 = vector.load %arg3[%c0_3, %c0_4] : memref<16x128xf32, #tpu.memory_space<vmem>>, vector<16x128xf32>
    tpu.vector_store %arg3[%c0_3, %c0_4], %2 {strides = array<i32>} : memref<16x128xf32, #tpu.memory_space<vmem>>, vector<16x128xf32>,
    %cst_5 = arith.constant dense<0.000000e+00> : vector<128xf32>
    %4 = vector.multi_reduction <add>, %2, %cst_5 [0] : vector<16x128xf32> to vector<128xf32>
    %5 = vector.shape_cast %4 : vector<128xf32> to vector<1x128xf32>
    %6 = arith.mulf %2, %2 : vector<16x128xf32>
    %cst_6 = arith.constant dense<0.000000e+00> : vector<128xf32>
    %7 = vector.multi_reduction <add>, %6, %cst_6 [0] : vector<16x128xf32> to vector<128xf32>
    %8 = vector.shape_cast %7 : vector<128xf32> to vector<1x128xf32>
    %cst_7 = arith.constant 0.000000e+00 : f32
    %9 = vector.broadcast %cst_7 : f32 to vector<6x128xf32>
    %10 = tpu.concatenate %5, %8, %9 in 0 : vector<1x128xf32>, vector<1x128xf32>, vector<6x128xf32> -> vector<8x128xf32>
    %c0_8 = arith.constant 0 : index
    %c0_9 = arith.constant 0 : index
    %c0_10 = arith.constant 0 : index
    %11 = vector.load %arg4[%c0_8, %c0_9, %c0_10] : memref<1x8x128xf32, #tpu.memory_space<vmem>>, vector<1x8x128xf32>
    %12 = vector.shape_cast %11 : vector<1x8x128xf32> to vector<8x128xf32>
    %13 = vector.shape_cast %10 : vector<8x128xf32> to vector<1x8x128xf32>
    tpu.vector_store %arg4[%c0_8, %c0_9, %c0_10], %13 {strides = array<i32>} : memref<1x8x128xf32, #tpu.memory_space<vmem>>, vector<1x8x128xf32>,
    return
  }
  func.func @transform_0(%arg0: i32) -> (i32, i32) {
    %c0_i32 = arith.constant 0 : i32
    %c0_i32_0 = arith.constant 0 : i32
    return %arg0, %c0_i32 : i32, i32
  }
  func.func @transform_1(%arg0: i32) -> (i32, i32) {
    %c0_i32 = arith.constant 0 : i32
    %c0_i32_0 = arith.constant 0 : i32
    %c0_i32_1 = arith.constant 0 : i32
    return %c0_i32, %c0_i32_0 : i32, i32
  }
  func.func @transform_2(%arg0: i32) -> (i32, i32) {
    %c0_i32 = arith.constant 0 : i32
    %c0_i32_0 = arith.constant 0 : i32
    return %arg0, %c0_i32 : i32, i32
  }
  func.func @transform_3(%arg0: i32) -> (i32, i32, i32) {
    %c0_i32 = arith.constant 0 : i32
    %c0_i32_0 = arith.constant 0 : i32
    %c0_i32_1 = arith.constant 0 : i32
    return %arg0, %c0_i32, %c0_i32_0 : i32, i32, i32
  }
}

module attributes {stable_mosaic.version = 11 : i64} {
  func.func @bn_relu_conv2_kernel(%arg0: i32, %arg1: memref<16x128xf32, #tpu.memory_space<vmem>>, %arg2: memref<1x128xf32, #tpu.memory_space<vmem>>, %arg3: memref<1x128xf32, #tpu.memory_space<vmem>>, %arg4: memref<128x128xf32, #tpu.memory_space<vmem>>, %arg5: memref<1x128xf32, #tpu.memory_space<vmem>>, %arg6: memref<16x128xf32, #tpu.memory_space<vmem>>) attributes {dimension_semantics = [#tpu.dimension_semantics<parallel>], iteration_bounds = array<i64: 1>, scalar_prefetch = 0 : i64, scratch_operands = 0 : i64, tpu.core_type = #tpu.core_type<tc>, window_params = [{transform_indices = @transform_0, window_bounds = array<i64: 16, 128>}, {pipeline_mode = #tpu.pipeline_mode<synchronous>, transform_indices = @transform_1, window_bounds = array<i64: 1, 128>}, {pipeline_mode = #tpu.pipeline_mode<synchronous>, transform_indices = @transform_2, window_bounds = array<i64: 1, 128>}, {pipeline_mode = #tpu.pipeline_mode<synchronous>, transform_indices = @transform_3, window_bounds = array<i64: 128, 128>}, {pipeline_mode = #tpu.pipeline_mode<synchronous>, transform_indices = @transform_4, window_bounds = array<i64: 1, 128>}, {transform_indices = @transform_5, window_bounds = array<i64: 16, 128>}]} {
    %c0 = arith.constant 0 : index
    %c0_0 = arith.constant 0 : index
    %0 = vector.load %arg1[%c0, %c0_0] : memref<16x128xf32, #tpu.memory_space<vmem>>, vector<16x128xf32>
    %c0_1 = arith.constant 0 : index
    %c0_2 = arith.constant 0 : index
    %1 = vector.load %arg2[%c0_1, %c0_2] : memref<1x128xf32, #tpu.memory_space<vmem>>, vector<1x128xf32>
    %2 = vector.broadcast %1 : vector<1x128xf32> to vector<16x128xf32>
    %3 = arith.mulf %0, %2 : vector<16x128xf32>
    %c0_3 = arith.constant 0 : index
    %c0_4 = arith.constant 0 : index
    %4 = vector.load %arg3[%c0_3, %c0_4] : memref<1x128xf32, #tpu.memory_space<vmem>>, vector<1x128xf32>
    %5 = vector.broadcast %4 : vector<1x128xf32> to vector<16x128xf32>
    %6 = arith.addf %3, %5 : vector<16x128xf32>
    %cst = arith.constant 0.000000e+00 : f32
    %7 = vector.broadcast %cst : f32 to vector<16x128xf32>
    %8 = arith.maximumf %6, %7 : vector<16x128xf32>
    %c0_5 = arith.constant 0 : index
    %c0_6 = arith.constant 0 : index
    %9 = vector.load %arg4[%c0_5, %c0_6] : memref<128x128xf32, #tpu.memory_space<vmem>>, vector<128x128xf32>
    %cst_7 = arith.constant dense<0.000000e+00> : vector<16x128xf32>
    %10 = tpu.matmul %8, %9, %cst_7 {dimension_numbers = #tpu.dot_dimension_numbers<[1], [0], [0], [1], [0, 0, 1, 1], [], []>} : vector<16x128xf32>, vector<128x128xf32>, vector<16x128xf32> -> vector<16x128xf32>
    %c0_8 = arith.constant 0 : index
    %c0_9 = arith.constant 0 : index
    %11 = vector.load %arg5[%c0_8, %c0_9] : memref<1x128xf32, #tpu.memory_space<vmem>>, vector<1x128xf32>
    %12 = vector.broadcast %11 : vector<1x128xf32> to vector<16x128xf32>
    %13 = arith.addf %10, %12 : vector<16x128xf32>
    %c0_10 = arith.constant 0 : index
    %c0_11 = arith.constant 0 : index
    %14 = vector.load %arg6[%c0_10, %c0_11] : memref<16x128xf32, #tpu.memory_space<vmem>>, vector<16x128xf32>
    tpu.vector_store %arg6[%c0_10, %c0_11], %13 {strides = array<i32>} : memref<16x128xf32, #tpu.memory_space<vmem>>, vector<16x128xf32>,
    return
  }
  func.func @transform_0(%arg0: i32) -> (i32, i32) {
    %c0_i32 = arith.constant 0 : i32
    %c0_i32_0 = arith.constant 0 : i32
    return %arg0, %c0_i32 : i32, i32
  }
  func.func @transform_1(%arg0: i32) -> (i32, i32) {
    %c0_i32 = arith.constant 0 : i32
    %c0_i32_0 = arith.constant 0 : i32
    %c0_i32_1 = arith.constant 0 : i32
    return %c0_i32, %c0_i32_0 : i32, i32
  }
  func.func @transform_2(%arg0: i32) -> (i32, i32) {
    %c0_i32 = arith.constant 0 : i32
    %c0_i32_0 = arith.constant 0 : i32
    %c0_i32_1 = arith.constant 0 : i32
    return %c0_i32, %c0_i32_0 : i32, i32
  }
  func.func @transform_3(%arg0: i32) -> (i32, i32) {
    %c0_i32 = arith.constant 0 : i32
    %c0_i32_0 = arith.constant 0 : i32
    %c0_i32_1 = arith.constant 0 : i32
    return %c0_i32, %c0_i32_0 : i32, i32
  }
  func.func @transform_4(%arg0: i32) -> (i32, i32) {
    %c0_i32 = arith.constant 0 : i32
    %c0_i32_0 = arith.constant 0 : i32
    %c0_i32_1 = arith.constant 0 : i32
    return %c0_i32, %c0_i32_0 : i32, i32
  }
  func.func @transform_5(%arg0: i32) -> (i32, i32) {
    %c0_i32 = arith.constant 0 : i32
    %c0_i32_0 = arith.constant 0 : i32
    return %arg0, %c0_i32 : i32, i32
  }
}

</mosaic_0001>

<llo_original>
// kernel: project_mlp_forward.2
$region0: #{project_mlp_forward.2}
  #allocation0 [shape = 'u32[]', space=smem, size = 0x4, offset = 0x4, fixed_abs, tag = 'smem constant byte address 0x4 - core index']
  #allocation1 [shape = 'u32[144,128]{1,0:T(1,128)}', space=vmem, size = 0x12000, scoped, tag = 'internal scratch']
  %s0 = inlined_call_operand.vmem [shape: f32[16,128], index: 0, kind: input, shape index: {}]
  %s1 = inlined_call_operand.vmem [shape: f32[128,128], index: 1, kind: input, shape index: {}]
  %s2 = inlined_call_operand.vmem [shape: f32[16,128], index: 2, kind: output, shape index: {0}]
  %s3 = inlined_call_operand.vmem [shape: f32[1,8,128], index: 3, kind: output, shape index: {1}]
  %4 = xla_tuple %s2, %s3
  %s5 = sld [smem:[#allocation0]]
  $region26: #{project_mlp_forward.2} parent=0
    _
  %s7 = ssub.s32 1, %s5
  %s8 = scalar_select 0, %s7, %s5
  // Predicated region
  $region2: #{project_mlp_forward.2} parent=0 // pred_check
    _
  $region3: #{project_mlp_forward.2} parent=0 // pred_check_branch
    %10 = sbr.rel (0) target = $region5
  $region4: #{project_mlp_forward.2} parent=0 // pred_region
    _
  $region5: #{project_mlp_forward.2} parent=0 // pred_fallthru
    _
  // Predicated region
  $region6: #{project_mlp_forward.2} parent=0 // pred_check
    _
  $region7: #{project_mlp_forward.2} parent=0 // pred_check_branch
    %12 = sbr.rel (0) target = $region9
  $region8: #{project_mlp_forward.2} parent=0 // pred_region
    _
  $region9: #{project_mlp_forward.2} parent=0 // pred_fallthru
    _
  %v13 = vld [vmem:[%s0] sm:$0xff]
  %v14 = vld [vmem:[%s0 + $0x8] sm:$0xff]
  %v15 = vld [vmem:[%s1] sm:$0xff]
  %v16 = vld [vmem:[%s1 + $0x8] sm:$0xff]
  %v17 = vld [vmem:[%s1 + $0x10] sm:$0xff]
  %v18 = vld [vmem:[%s1 + $0x18] sm:$0xff]
  %v19 = vld [vmem:[%s1 + $0x20] sm:$0xff]
  %v20 = vld [vmem:[%s1 + $0x28] sm:$0xff]
  %v21 = vld [vmem:[%s1 + $0x30] sm:$0xff]
  %v22 = vld [vmem:[%s1 + $0x38] sm:$0xff]
  %v23 = vld [vmem:[%s1 + $0x40] sm:$0xff]
  %v24 = vld [vmem:[%s1 + $0x48] sm:$0xff]
  %v25 = vld [vmem:[%s1 + $0x50] sm:$0xff]
  %v26 = vld [vmem:[%s1 + $0x58] sm:$0xff]
  %v27 = vld [vmem:[%s1 + $0x60] sm:$0xff]
  %v28 = vld [vmem:[%s1 + $0x68] sm:$0xff]
  %v29 = vld [vmem:[%s1 + $0x70] sm:$0xff]
  %v30 = vld [vmem:[%s1 + $0x78] sm:$0xff]
  %31 = vmatprep.subr.mxu0 0.0
  %32 = vmatpush1.msra.mxu0 %v15
  %33 = vmatprep.subr.mxu0 0.0
  %34 = vmatpush1.msra.mxu0 %v16
  %35 = vmatprep.subr.mxu0 0.0
  %36 = vmatpush1.msra.mxu0 %v17
  %37 = vmatprep.subr.mxu0 0.0
  %38 = vmatpush1.msra.mxu0 %v18
  %39 = vmatprep.subr.mxu0 0.0
  %40 = vmatpush1.msra.mxu0 %v19
  %41 = vmatprep.subr.mxu0 0.0
  %42 = vmatpush1.msra.mxu0 %v20
  %43 = vmatprep.subr.mxu0 0.0
  %44 = vmatpush1.msra.mxu0 %v21
  %45 = vmatprep.subr.mxu0 0.0
  %46 = vmatpush1.msra.mxu0 %v22
  %47 = vmatprep.subr.mxu0 0.0
  %48 = vmatpush1.msra.mxu0 %v23
  %49 = vmatprep.subr.mxu0 0.0
  %50 = vmatpush1.msra.mxu0 %v24
  %51 = vmatprep.subr.mxu0 0.0
  %52 = vmatpush1.msra.mxu0 %v25
  %53 = vmatprep.subr.mxu0 0.0
  %54 = vmatpush1.msra.mxu0 %v26
  %55 = vmatprep.subr.mxu0 0.0
  %56 = vmatpush1.msra.mxu0 %v27
  %57 = vmatprep.subr.mxu0 0.0
  %58 = vmatpush1.msra.mxu0 %v28
  %59 = vmatprep.subr.mxu0 0.0
  %60 = vmatpush1.msra.mxu0 %v29
  %61 = vmatprep.subr.mxu0 0.0
  %62 = vmatpush1.msra.mxu0 %v30
  %63 = vmatprep.subr.mxu0 0.0
  %64 = vmatpush1.msra.mxu0 0.0
  %65 = vmatprep.subr.mxu0 0.0
  %66 = vmatpush1.msra.mxu0 0.0
  %67 = vmatprep.subr.mxu0 0.0
  %68 = vmatpush1.msra.mxu0 0.0
  %69 = vmatprep.subr.mxu0 0.0
  %70 = vmatpush1.msra.mxu0 0.0
  %71 = vmatprep.subr.mxu0 0.0
  %72 = vmatpush1.msra.mxu0 0.0
  %73 = vmatprep.subr.mxu0 0.0
  %74 = vmatpush1.msra.mxu0 0.0
  %75 = vmatprep.subr.mxu0 0.0
  %76 = vmatpush1.msra.mxu0 0.0
  %77 = vmatprep.subr.mxu0 0.0
  %78 = vmatpush1.msra.mxu0 0.0
  %79 = vmatprep.subr.mxu0 0.0
  %80 = vmatpush1.msra.mxu0 0.0
  %81 = vmatprep.subr.mxu0 0.0
  %82 = vmatpush1.msra.mxu0 0.0
  %83 = vmatprep.subr.mxu0 0.0
  %84 = vmatpush1.msra.mxu0 0.0
  %85 = vmatprep.subr.mxu0 0.0
  %86 = vmatpush1.msra.mxu0 0.0
  %87 = vmatprep.subr.mxu0 0.0
  %88 = vmatpush1.msra.mxu0 0.0
  %89 = vmatprep.subr.mxu0 0.0
  %90 = vmatpush1.msra.mxu0 0.0
  %91 = vmatprep.subr.mxu0 0.0
  %92 = vmatpush1.msra.mxu0 0.0
  %93 = vmatprep.subr.mxu0 0.0
  %94 = vmatpush1.msra.mxu0 0.0
  %95 = vmatprep.mubr.f32.mxu0 0.0
  %96 = vmatmul.mubr.f32.gmra.mrb[0].mxu0 %v13
  %v97 = vpop.f32.mrb[0].mxu0
  %v98 = vadd.f32 0.0, %v97
  %v99 = vpop.f32.mrb[0].mxu0
  %100 = vmatprep.mubr.f32.mxu0 0.0
  %101 = vmatmul.mubr.f32.gmra.mrb[0].mxu0 %v14
  %v102 = vpop.f32.mrb[0].mxu0
  %v103 = vadd.f32 0.0, %v102
  %v104 = vpop.f32.mrb[0].mxu0
  %105 = vdwg.mxu0
  %106 = vst [vmem:[%s2] sm:$0xff] %v98
  %107 = vst [vmem:[%s2 + $0x8] sm:$0xff] %v103
  %v108 = vadd.f32 %v98, %v103
  %v109 = vrot.slane %v108, 4
  %v110 = vadd.f32 %v108, %v109
  %v111 = vrot.slane %v110, 2
  %v112 = vadd.f32 %v110, %v111
  %v113 = vrot.slane %v112, 1
  %v114 = vadd.f32 %v112, %v113
  %v115 = vmul.f32 %v98, %v98
  %v116 = vmul.f32 %v103, %v103
  %v117 = vadd.f32 %v115, %v116
  %v118 = vrot.slane %v117, 4
  %v119 = vadd.f32 %v117, %v118
  %v120 = vrot.slane %v119, 2
  %v121 = vadd.f32 %v119, %v120
  %v122 = vrot.slane %v121, 1
  %v123 = vadd.f32 %v121, %v122
  %vm124 = vcmask 1040384
  %v125 = vsel %vm124, %v114, %v123
  %vm126 = vcmask 1041408
  %v127 = vsel %vm126, %v125, 0.0
  %128 = vst [vmem:[%s3] sm:$0xff] %v127
  // Predicated region
  $region10: #{project_mlp_forward.2} parent=0 // pred_check
    _
  $region11: #{project_mlp_forward.2} parent=0 // pred_check_branch
    %130 = sbr.rel (0) target = $region13
  $region12: #{project_mlp_forward.2} parent=0 // pred_region
    _
  $region13: #{project_mlp_forward.2} parent=0 // pred_fallthru
    _
  // Predicated region
  $region14: #{project_mlp_forward.2} parent=0 // pred_check
    _
  $region15: #{project_mlp_forward.2} parent=0 // pred_check_branch
    %132 = sbr.rel (0) target = $region17
  $region16: #{project_mlp_forward.2} parent=0 // pred_region
    _
  $region17: #{project_mlp_forward.2} parent=0 // pred_fallthru
    _
  // Predicated region
  $region18: #{project_mlp_forward.2} parent=0 // pred_check
    _
  $region19: #{project_mlp_forward.2} parent=0 // pred_check_branch
    %134 = sbr.rel (0) target = $region21
  $region20: #{project_mlp_forward.2} parent=0 // pred_region
    _
  $region21: #{project_mlp_forward.2} parent=0 // pred_fallthru
    _
  // Predicated region
  $region22: #{project_mlp_forward.2} parent=0 // pred_check
    _
  $region23: #{project_mlp_forward.2} parent=0 // pred_check_branch
    %136 = sbr.rel (0) target = $region25
  $region24: #{project_mlp_forward.2} parent=0 // pred_region
    _
  $region25: #{project_mlp_forward.2} parent=0 // pred_fallthru
    _

// kernel: project_mlp_forward.3
$region0: #{project_mlp_forward.3}
  #allocation0 [shape = 'u32[]', space=smem, size = 0x4, offset = 0x4, fixed_abs, tag = 'smem constant byte address 0x4 - core index']
  #allocation1 [shape = 'u32[144,128]{1,0:T(1,128)}', space=vmem, size = 0x12000, scoped, tag = 'internal scratch']
  %s0 = inlined_call_operand.vmem [shape: f32[16,128], index: 0, kind: input, shape index: {}]
  %s1 = inlined_call_operand.vmem [shape: f32[1,128], index: 1, kind: input, shape index: {}]
  %s2 = inlined_call_operand.vmem [shape: f32[1,128], index: 2, kind: input, shape index: {}]
  %s3 = inlined_call_operand.vmem [shape: f32[128,128], index: 3, kind: input, shape index: {}]
  %s4 = inlined_call_operand.vmem [shape: f32[1,128], index: 4, kind: input, shape index: {}]
  %s5 = inlined_call_operand.vmem [shape: f32[16,128], index: 5, kind: output, shape index: {}]
  %s6 = sld [smem:[#allocation0]]
  $region30: #{project_mlp_forward.3} parent=0
    _
  %s8 = ssub.s32 1, %s6
  %s9 = scalar_select 0, %s8, %s6
  // Predicated region
  $region2: #{project_mlp_forward.3} parent=0 // pred_check
    _
  $region3: #{project_mlp_forward.3} parent=0 // pred_check_branch
    %11 = sbr.rel (0) target = $region5
  $region4: #{project_mlp_forward.3} parent=0 // pred_region
    _
  $region5: #{project_mlp_forward.3} parent=0 // pred_fallthru
    _
  // Predicated region
  $region6: #{project_mlp_forward.3} parent=0 // pred_check
    _
  $region7: #{project_mlp_forward.3} parent=0 // pred_check_branch
    %13 = sbr.rel (0) target = $region9
  $region8: #{project_mlp_forward.3} parent=0 // pred_region
    _
  $region9: #{project_mlp_forward.3} parent=0 // pred_fallthru
    _
  // Predicated region
  $region10: #{project_mlp_forward.3} parent=0 // pred_check
    _
  $region11: #{project_mlp_forward.3} parent=0 // pred_check_branch
    %15 = sbr.rel (0) target = $region13
  $region12: #{project_mlp_forward.3} parent=0 // pred_region
    _
  $region13: #{project_mlp_forward.3} parent=0 // pred_fallthru
    _
  // Predicated region
  $region14: #{project_mlp_forward.3} parent=0 // pred_check
    _
  $region15: #{project_mlp_forward.3} parent=0 // pred_check_branch
    %17 = sbr.rel (0) target = $region17
  $region16: #{project_mlp_forward.3} parent=0 // pred_region
    _
  $region17: #{project_mlp_forward.3} parent=0 // pred_fallthru
    _
  // Predicated region
  $region18: #{project_mlp_forward.3} parent=0 // pred_check
    _
  $region19: #{project_mlp_forward.3} parent=0 // pred_check_branch
    %19 = sbr.rel (0) target = $region21
  $region20: #{project_mlp_forward.3} parent=0 // pred_region
    _
  $region21: #{project_mlp_forward.3} parent=0 // pred_fallthru
    _
  %v20 = vld [vmem:[%s0] sm:$0xff]
  %v21 = vld [vmem:[%s0 + $0x8] sm:$0xff]
  %v22 = vld [vmem:[%s1] sm:$0x1]
  %v24 = vlaneseq
  %v25 = vshrl.u32 %v24, 7
  %v26 = vsub.s32 0, %v25
  %v27 = vrot.slane %v22, %v26
  %v29 = vmul.f32 %v20, %v27
  %v30 = vmul.f32 %v21, %v27
  %v31 = vld [vmem:[%s2] sm:$0x1]
  %v33 = vlaneseq
  %v34 = vshrl.u32 %v33, 7
  %v35 = vsub.s32 0, %v34
  %v36 = vrot.slane %v31, %v35
  %v38 = vadd.f32 %v29, %v36
  %v39 = vadd.f32 %v30, %v36
  %v40 = vmax.f32 %v38, 0.0
  %v41 = vmax.f32 %v39, 0.0
  %v42 = vld [vmem:[%s3] sm:$0xff]
  %v43 = vld [vmem:[%s3 + $0x8] sm:$0xff]
  %v44 = vld [vmem:[%s3 + $0x10] sm:$0xff]
  %v45 = vld [vmem:[%s3 + $0x18] sm:$0xff]
  %v46 = vld [vmem:[%s3 + $0x20] sm:$0xff]
  %v47 = vld [vmem:[%s3 + $0x28] sm:$0xff]
  %v48 = vld [vmem:[%s3 + $0x30] sm:$0xff]
  %v49 = vld [vmem:[%s3 + $0x38] sm:$0xff]
  %v50 = vld [vmem:[%s3 + $0x40] sm:$0xff]
  %v51 = vld [vmem:[%s3 + $0x48] sm:$0xff]
  %v52 = vld [vmem:[%s3 + $0x50] sm:$0xff]
  %v53 = vld [vmem:[%s3 + $0x58] sm:$0xff]
  %v54 = vld [vmem:[%s3 + $0x60] sm:$0xff]
  %v55 = vld [vmem:[%s3 + $0x68] sm:$0xff]
  %v56 = vld [vmem:[%s3 + $0x70] sm:$0xff]
  %v57 = vld [vmem:[%s3 + $0x78] sm:$0xff]
  %v58 = vld [vmem:[%s4] sm:$0x1]
  %v60 = vlaneseq
  %v61 = vshrl.u32 %v60, 7
  %v62 = vsub.s32 0, %v61
  %v63 = vrot.slane %v58, %v62
  %65 = vmatprep.subr.mxu0 0.0
  %66 = vmatpush1.msra.mxu0 %v42
  %67 = vmatprep.subr.mxu0 0.0
  %68 = vmatpush1.msra.mxu0 %v43
  %69 = vmatprep.subr.mxu0 0.0
  %70 = vmatpush1.msra.mxu0 %v44
  %71 = vmatprep.subr.mxu0 0.0
  %72 = vmatpush1.msra.mxu0 %v45
  %73 = vmatprep.subr.mxu0 0.0
  %74 = vmatpush1.msra.mxu0 %v46
  %75 = vmatprep.subr.mxu0 0.0
  %76 = vmatpush1.msra.mxu0 %v47
  %77 = vmatprep.subr.mxu0 0.0
  %78 = vmatpush1.msra.mxu0 %v48
  %79 = vmatprep.subr.mxu0 0.0
  %80 = vmatpush1.msra.mxu0 %v49
  %81 = vmatprep.subr.mxu0 0.0
  %82 = vmatpush1.msra.mxu0 %v50
  %83 = vmatprep.subr.mxu0 0.0
  %84 = vmatpush1.msra.mxu0 %v51
  %85 = vmatprep.subr.mxu0 0.0
  %86 = vmatpush1.msra.mxu0 %v52
  %87 = vmatprep.subr.mxu0 0.0
  %88 = vmatpush1.msra.mxu0 %v53
  %89 = vmatprep.subr.mxu0 0.0
  %90 = vmatpush1.msra.mxu0 %v54
  %91 = vmatprep.subr.mxu0 0.0
  %92 = vmatpush1.msra.mxu0 %v55
  %93 = vmatprep.subr.mxu0 0.0
  %94 = vmatpush1.msra.mxu0 %v56
  %95 = vmatprep.subr.mxu0 0.0
  %96 = vmatpush1.msra.mxu0 %v57
  %97 = vmatprep.subr.mxu0 0.0
  %98 = vmatpush1.msra.mxu0 0.0
  %99 = vmatprep.subr.mxu0 0.0
  %100 = vmatpush1.msra.mxu0 0.0
  %101 = vmatprep.subr.mxu0 0.0
  %102 = vmatpush1.msra.mxu0 0.0
  %103 = vmatprep.subr.mxu0 0.0
  %104 = vmatpush1.msra.mxu0 0.0
  %105 = vmatprep.subr.mxu0 0.0
  %106 = vmatpush1.msra.mxu0 0.0
  %107 = vmatprep.subr.mxu0 0.0
  %108 = vmatpush1.msra.mxu0 0.0
  %109 = vmatprep.subr.mxu0 0.0
  %110 = vmatpush1.msra.mxu0 0.0
  %111 = vmatprep.subr.mxu0 0.0
  %112 = vmatpush1.msra.mxu0 0.0
  %113 = vmatprep.subr.mxu0 0.0
  %114 = vmatpush1.msra.mxu0 0.0
  %115 = vmatprep.subr.mxu0 0.0
  %116 = vmatpush1.msra.mxu0 0.0
  %117 = vmatprep.subr.mxu0 0.0
  %118 = vmatpush1.msra.mxu0 0.0
  %119 = vmatprep.subr.mxu0 0.0
  %120 = vmatpush1.msra.mxu0 0.0
  %121 = vmatprep.subr.mxu0 0.0
  %122 = vmatpush1.msra.mxu0 0.0
  %123 = vmatprep.subr.mxu0 0.0
  %124 = vmatpush1.msra.mxu0 0.0
  %125 = vmatprep.subr.mxu0 0.0
  %126 = vmatpush1.msra.mxu0 0.0
  %127 = vmatprep.subr.mxu0 0.0
  %128 = vmatpush1.msra.mxu0 0.0
  %129 = vmatprep.mubr.f32.mxu0 0.0
  %130 = vmatmul.mubr.f32.gmra.mrb[0].mxu0 %v40
  %v131 = vpop.f32.mrb[0].mxu0
  %v132 = vadd.f32 %v63, %v131
  %v133 = vpop.f32.mrb[0].mxu0
  %134 = vmatprep.mubr.f32.mxu0 0.0
  %135 = vmatmul.mubr.f32.gmra.mrb[0].mxu0 %v41
  %v136 = vpop.f32.mrb[0].mxu0
  %v137 = vadd.f32 %v63, %v136
  %v138 = vpop.f32.mrb[0].mxu0
  %139 = vdwg.mxu0
  %140 = vst [vmem:[%s5] sm:$0xff] %v132
  %141 = vst [vmem:[%s5 + $0x8] sm:$0xff] %v137
  // Predicated region
  $region22: #{project_mlp_forward.3} parent=0 // pred_check
    _
  $region23: #{project_mlp_forward.3} parent=0 // pred_check_branch
    %143 = sbr.rel (0) target = $region25
  $region24: #{project_mlp_forward.3} parent=0 // pred_region
    _
  $region25: #{project_mlp_forward.3} parent=0 // pred_fallthru
    _
  // Predicated region
  $region26: #{project_mlp_forward.3} parent=0 // pred_check
    _
  $region27: #{project_mlp_forward.3} parent=0 // pred_check_branch
    %145 = sbr.rel (0) target = $region29
  $region28: #{project_mlp_forward.3} parent=0 // pred_region
    _
  $region29: #{project_mlp_forward.3} parent=0 // pred_fallthru
    _

</llo_original>
